<compile_context>
chip_gen: v5e
topology: v5e:2x2
jax: 0.10.0
libtpu: 0.0.40
codegen_flags: <defaults>
</compile_context>

<pallas_src>
import functools

import jax
import jax.numpy as jnp
from jax.experimental import pallas as pl
from jax.experimental.pallas import tpu as pltpu

LANES = 128
SUBLANES = 8
MAX_CHUNK_ROWS = 512            # 512 x 128 f32 = 256 KiB live per temporary
TARGET_BLOCK_BYTES = 4 << 20    # ~4 MiB of the widest input per pipeline buffer
VMEM_LIMIT_BYTES = 32 << 20     # raise v5e's 16 MiB scoped default; safe on all gens


def _round_up(x: int, m: int) -> int:
    return ((x + m - 1) // m) * m


def _cdiv(a: int, b: int) -> int:
    return -(-a // b)


def _mse_partial_kernel(pred_ref, targ_ref, out_ref, *, block_rows, chunk_rows,
                        valid_rows, ragged, unroll):
    """One grid step -> one (8, 128) f32 partial sum of squared differences."""
    i = pl.program_id(0)
    n_chunks = block_rows // chunk_rows

    def partial_sum(masked):
        def body(k, acc):
            r0 = pl.multiple_of(k * chunk_rows, SUBLANES)
            p = pred_ref[pl.ds(r0, chunk_rows), :].astype(jnp.float32)
            t = targ_ref[pl.ds(r0, chunk_rows), :].astype(jnp.float32)
            sq = (p - t) * (p - t)
            if masked:
                # Rows past the real array end hold unspecified data; zero them.
                row_ids = (i * block_rows + r0
                           + jax.lax.broadcasted_iota(jnp.int32, sq.shape, 0))
                sq = jnp.where(row_ids < valid_rows, sq, 0.0)
            # (chunk_rows, 128) -> (8, 128) with pure vreg adds (VPU only); the
            # one cross-lane reduce of the tiny partials happens in the wrapper.
            sq3 = sq.reshape(chunk_rows // SUBLANES, SUBLANES, LANES)
            return acc + sq3.sum(axis=0)

        return jax.lax.fori_loop(
            0, n_chunks, body,
            jnp.zeros((SUBLANES, LANES), jnp.float32),
            unroll=unroll)

    if ragged:
        last = pl.num_programs(0) - 1

        @pl.when(i < last)
        def _():
            out_ref[...] = partial_sum(False)[None]

        @pl.when(i == last)
        def _():
            out_ref[...] = partial_sum(True)[None]
    else:
        out_ref[...] = partial_sum(False)[None]


def mse_loss(prediction: jax.Array, target: jax.Array) -> jax.Array:
    """Pallas implementation of MSELoss.forward from the PyTorch module."""
    if prediction.ndim < 2:
        raise ValueError("MSELoss.forward sums over dim 1; prediction must be >= 2-D")

    # target.view(prediction.shape)
    target = target.reshape(prediction.shape)

    numel = int(prediction.size)
    # sum over dim 1 then mean over the rest => divide total SSE by numel / C
    denom = numel // prediction.shape[1]

    pred_flat = prediction.reshape(-1)   # free reshapes (contiguous)
    targ_flat = target.reshape(-1)

    # Sub-128-element tail is folded in with plain jnp on a tiny suffix slice
    # (no full-array jnp.pad rewrite of both inputs).
    rem = numel % LANES
    main = numel - rem
    tail_sse = jnp.float32(0.0)
    if rem:
        pt = pred_flat[main:].astype(jnp.float32)
        tt = targ_flat[main:].astype(jnp.float32)
        tail_sse = jnp.sum((pt - tt) * (pt - tt))
        # TODO(synk): this prefix slice copies `main` elements once per input
        # when numel is not a multiple of 128 (rare for NN tensors).
        pred_flat = pred_flat[:main]
        targ_flat = targ_flat[:main]

    if main == 0:
        return tail_sse / jnp.float32(denom)

    rows = main // LANES
    pred2d = pred_flat.reshape(rows, LANES)
    targ2d = targ_flat.reshape(rows, LANES)

    # ---- block sizing: dtype-aware, ~4 MiB of the widest input per block ----
    p_item = jnp.dtype(pred2d.dtype).itemsize
    t_item = jnp.dtype(targ2d.dtype).itemsize
    row_bytes = LANES * max(p_item, t_item)

    chunk_rows = min(MAX_CHUNK_ROWS, _round_up(rows, SUBLANES))
    max_block_rows = max(
        chunk_rows, (TARGET_BLOCK_BYTES // row_bytes) // chunk_rows * chunk_rows)
    padded_rows = _round_up(rows, chunk_rows)
    # Aim for >= 2 grid steps when possible so v7x can shard across its 2 TCs.
    half_rows = _round_up(_cdiv(padded_rows, 2), chunk_rows)
    block_rows = max(chunk_rows, min(max_block_rows, half_rows))

    n_tiles = _cdiv(rows, block_rows)
    ragged = (rows % block_rows) != 0
    n_chunks = block_rows // chunk_rows
    unroll = True if n_chunks <= 8 else 8

    kernel = functools.partial(
        _mse_partial_kernel,
        block_rows=block_rows,
        chunk_rows=chunk_rows,
        valid_rows=rows,
        ragged=ragged,
        unroll=unroll,
    )

    in_bytes = rows * LANES * (p_item + t_item)
    out_bytes = n_tiles * SUBLANES * LANES * 4
    cost = pl.CostEstimate(
        flops=3 * main,           # sub, mul, add per element (approx.)
        transcendentals=0,
        bytes_accessed=int(in_bytes + out_bytes),
    )

    partials = pl.pallas_call(
        kernel,
        out_shape=jax.ShapeDtypeStruct((n_tiles, SUBLANES, LANES), jnp.float32),
        grid=(n_tiles,),
        in_specs=[
            pl.BlockSpec((block_rows, LANES), lambda i: (i, 0)),
            pl.BlockSpec((block_rows, LANES), lambda i: (i, 0)),
        ],
        out_specs=pl.BlockSpec((1, SUBLANES, LANES), lambda i: (i, 0, 0)),
        compiler_params=pltpu.CompilerParams(
            dimension_semantics=("parallel",),
            vmem_limit_bytes=VMEM_LIMIT_BYTES,
        ),
        cost_estimate=cost,
    )(pred2d, targ2d)

    total_sse = jnp.sum(partials) + tail_sse   # tiny (n_tiles, 8, 128) reduce in XLA
    return total_sse / jnp.float32(denom)


if __name__ == "__main__":
    key = jax.random.PRNGKey(0)
    k1, k2 = jax.random.split(key)

    # Small NCHW inputs consistent with the module's usage.
    N, C, H, W = 2, 4, 16, 16
    prediction = jax.random.normal(k1, (N, C, H, W), dtype=jnp.float32)
    # target arrives flattened-per-sample (module calls .view(pred.shape))
    target = jax.random.normal(k2, (N, C * H * W), dtype=jnp.float32)

    loss = mse_loss(prediction, target)
    jax.block_until_ready(loss)

    # Reference check in plain JAX.
    ref = jnp.mean(
        jnp.sum((prediction - target.reshape(prediction.shape)) ** 2, axis=1)
    )
    assert jnp.allclose(loss, ref, rtol=1e-5, atol=1e-5), (loss, ref)

    print("KERNEL_OK")
</pallas_src>

<mosaic_0001>
module attributes {stable_mosaic.version = 11 : i64} {
  func.func @_mse_partial_kernel(%arg0: i32, %arg1: memref<16x128xf32, #tpu.memory_space<vmem>>, %arg2: memref<16x128xf32, #tpu.memory_space<vmem>>, %arg3: memref<1x8x128xf32, #tpu.memory_space<vmem>>) attributes {dimension_semantics = [#tpu.dimension_semantics<parallel>], iteration_bounds = array<i64: 1>, scalar_prefetch = 0 : i64, scratch_operands = 0 : i64, tpu.core_type = #tpu.core_type<tc>, window_params = [{transform_indices = @transform_0, window_bounds = array<i64: 16, 128>}, {transform_indices = @transform_1, window_bounds = array<i64: 16, 128>}, {transform_indices = @transform_2, window_bounds = array<i64: 1, 8, 128>}]} {
    %cst = arith.constant 0.000000e+00 : f32
    %0 = vector.broadcast %cst : f32 to vector<8x128xf32>
    %c0_i32 = arith.constant 0 : i32
    %c16_i32 = arith.constant 16 : i32
    %1 = arith.muli %c0_i32, %c16_i32 : i32
    %2 = tpu.assume_multiple %1, 8 : i32
    %3 = arith.index_cast %2 : i32 to index
    %c0 = arith.constant 0 : index
    %4 = vector.load %arg1[%3, %c0] : memref<16x128xf32, #tpu.memory_space<vmem>>, vector<16x128xf32>
    %5 = arith.index_cast %2 : i32 to index
    %c0_0 = arith.constant 0 : index
    %6 = vector.load %arg2[%5, %c0_0] : memref<16x128xf32, #tpu.memory_space<vmem>>, vector<16x128xf32>
    %7 = arith.subf %4, %6 : vector<16x128xf32>
    %8 = arith.subf %4, %6 : vector<16x128xf32>
    %9 = arith.mulf %7, %8 : vector<16x128xf32>
    %10 = vector.shape_cast %9 : vector<16x128xf32> to vector<2x8x128xf32>
    %cst_1 = arith.constant dense<0.000000e+00> : vector<8x128xf32>
    %11 = vector.multi_reduction <add>, %10, %cst_1 [0] : vector<2x8x128xf32> to vector<8x128xf32>
    %12 = arith.addf %0, %11 : vector<8x128xf32>
    %c1_i32 = arith.constant 1 : i32
    %13 = vector.shape_cast %12 : vector<8x128xf32> to vector<1x8x128xf32>
    %c0_2 = arith.constant 0 : index
    %c0_3 = arith.constant 0 : index
    %c0_4 = arith.constant 0 : index
    %14 = vector.load %arg3[%c0_2, %c0_3, %c0_4] : memref<1x8x128xf32, #tpu.memory_space<vmem>>, vector<1x8x128xf32>
    tpu.vector_store %arg3[%c0_2, %c0_3, %c0_4], %13 {strides = array<i32>} : memref<1x8x128xf32, #tpu.memory_space<vmem>>, vector<1x8x128xf32>,
    return
  }
  func.func @transform_0(%arg0: i32) -> (i32, i32) {
    %c0_i32 = arith.constant 0 : i32
    %c0_i32_0 = arith.constant 0 : i32
    return %arg0, %c0_i32 : i32, i32
  }
  func.func @transform_1(%arg0: i32) -> (i32, i32) {
    %c0_i32 = arith.constant 0 : i32
    %c0_i32_0 = arith.constant 0 : i32
    return %arg0, %c0_i32 : i32, i32
  }
  func.func @transform_2(%arg0: i32) -> (i32, i32, i32) {
    %c0_i32 = arith.constant 0 : i32
    %c0_i32_0 = arith.constant 0 : i32
    %c0_i32_1 = arith.constant 0 : i32
    return %arg0, %c0_i32, %c0_i32_0 : i32, i32, i32
  }
}

</mosaic_0001>

<llo_original>
// kernel: tpu_custom_call.1
$region0: #{tpu_custom_call.1}
  #allocation0 [shape = 'u32[]', space=smem, size = 0x4, offset = 0x4, fixed_abs, tag = 'smem constant byte address 0x4 - core index']
  #allocation1 [shape = 'u32[72,128]{1,0:T(1,128)}', space=vmem, size = 0x9000, scoped, tag = 'internal scratch']
  %s0 = inlined_call_operand.hbm [shape: f32[16,128], index: 0, kind: input, shape index: {}]
  %s1 = inlined_call_operand.hbm [shape: f32[16,128], index: 1, kind: input, shape index: {}]
  %s2 = inlined_call_operand.hbm [shape: f32[1,8,128], index: 2, kind: output, shape index: {}]
  %s3 = sld [smem:[#allocation0]]
  $region26: #{tpu_custom_call.1} parent=0
    _
  %s5 = ssub.s32 1, %s3
  %s6 = scalar_select 0, %s5, %s3
  $region1: #{tpu_custom_call.1} parent=0
    #allocation2 [shape = 'u8[8192]{0}', space=vmem, size = 0x2000, scoped, tag = 'input window, operand 0, single buffered']
    #allocation3 [shape = 's32[1]{0}', space=sflag, size = 0x4, scoped, tag = 'scoped memory for tpu_custom_call.1']
    #allocation4 [shape = 's32[1]{0}', space=sflag, size = 0x4, scoped, tag = 'scoped memory for tpu_custom_call.1']
    #allocation5 [shape = 'u8[8192]{0}', space=vmem, size = 0x2000, scoped, tag = 'input window, operand 1, single buffered']
    #allocation6 [shape = 's32[1]{0}', space=sflag, size = 0x4, scoped, tag = 'scoped memory for tpu_custom_call.1']
    #allocation7 [shape = 'u8[4096]{0}', space=vmem, size = 0x1000, scoped, tag = 'output window, operand 0, single buffered']
    %7 = vsyncpa [#allocation3], 0
    %8 = vsyncpa [#allocation6], 0
    %9 = vsyncpa [#allocation4], 0
    // Predicated region
    $region2: #{tpu_custom_call.1} parent=1 // pred_check
      _
    $region3: #{tpu_custom_call.1} parent=1 // pred_check_branch
      %11 = sbr.rel (0) target = $region5
    $region4: #{tpu_custom_call.1} parent=1 // pred_region
      %13 = vsyncadd [#allocation3], 0
      %s14 = sshll.u32 %s0, 4
      %s15 = int_to_ptr.hbm [resolvable:$true] %s14
      %s16 = sshll.u32 [#allocation2], 4
      %s17 = int_to_ptr.vmem [resolvable:$true] %s16
      %22 = dma.hbm_to_vmem [thread:$0]  %s15, 256, %s17, [#allocation3], 128, 128, 8
    $region5: #{tpu_custom_call.1} parent=1 // pred_fallthru
      _
    // Predicated region
    $region6: #{tpu_custom_call.1} parent=1 // pred_check
      _
    $region7: #{tpu_custom_call.1} parent=1 // pred_check_branch
      %24 = sbr.rel (0) target = $region9
    $region8: #{tpu_custom_call.1} parent=1 // pred_region
      %26 = vsyncadd [#allocation6], 0
      %s27 = sshll.u32 %s1, 4
      %s28 = int_to_ptr.hbm [resolvable:$true] %s27
      %s29 = sshll.u32 [#allocation5], 4
      %s30 = int_to_ptr.vmem [resolvable:$true] %s29
      %35 = dma.hbm_to_vmem [thread:$0]  %s28, 256, %s30, [#allocation6], 128, 128, 8
    $region9: #{tpu_custom_call.1} parent=1 // pred_fallthru
      _
    // Predicated region
    $region10: #{tpu_custom_call.1} parent=1 // pred_check
      _
    $region11: #{tpu_custom_call.1} parent=1 // pred_check_branch
      %37 = sbr.rel (0) target = $region13
    $region12: #{tpu_custom_call.1} parent=1 // pred_region
      %39 = dma.done [#allocation3], 256
    $region13: #{tpu_custom_call.1} parent=1 // pred_fallthru
      _
    // Predicated region
    $region14: #{tpu_custom_call.1} parent=1 // pred_check
      _
    $region15: #{tpu_custom_call.1} parent=1 // pred_check_branch
      %41 = sbr.rel (0) target = $region17
    $region16: #{tpu_custom_call.1} parent=1 // pred_region
      %43 = dma.done [#allocation6], 256
    $region17: #{tpu_custom_call.1} parent=1 // pred_fallthru
      _
    %v44 = vld [vmem:[#allocation2] sm:$0xff]
    %v45 = vld [vmem:[#allocation2 + $0x8] sm:$0xff]
    %v46 = vld [vmem:[#allocation5] sm:$0xff]
    %v47 = vld [vmem:[#allocation5 + $0x8] sm:$0xff]
    %v48 = vsub.f32 %v44, %v46
    %v49 = vsub.f32 %v45, %v47
    %v50 = vmul.f32 %v48, %v48
    %v51 = vmul.f32 %v49, %v49
    %v52 = vadd.f32 %v50, %v51
    %v53 = vadd.f32 %v52, 0.0
    %54 = vst [vmem:[#allocation7] sm:$0xff] %v53
    // Predicated region
    $region18: #{tpu_custom_call.1} parent=1 // pred_check
      _
    $region19: #{tpu_custom_call.1} parent=1 // pred_check_branch
      %56 = sbr.rel (0) target = $region21
    $region20: #{tpu_custom_call.1} parent=1 // pred_region
      %58 = vsyncadd [#allocation4], 0
      %s60 = sshll.u32 [#allocation7], 4
      %s61 = int_to_ptr.vmem [resolvable:$true] %s60
      %s62 = sshll.u32 %s2, 4
      %s63 = int_to_ptr.hbm [resolvable:$true] %s62
      %65 = dma.vmem_to_hbm [thread:$0]  %s61, 128, %s63, [#allocation4]
    $region21: #{tpu_custom_call.1} parent=1 // pred_fallthru
      _
    // Predicated region
    $region22: #{tpu_custom_call.1} parent=1 // pred_check
      _
    $region23: #{tpu_custom_call.1} parent=1 // pred_check_branch
      %67 = sbr.rel (0) target = $region25
    $region24: #{tpu_custom_call.1} parent=1 // pred_region
      %69 = dma.done [#allocation4], 128
    $region25: #{tpu_custom_call.1} parent=1 // pred_fallthru
      _
    %70 = vsyncpa [#allocation3], 1
    %71 = vsyncpa [#allocation6], 1
    %72 = vsyncpa [#allocation4], 1

</llo_original>
